<compile_context>
chip_gen: v6e
topology: v6e:2x2x1
jax: 0.10.0
libtpu: 0.0.40
codegen_flags: <defaults>
</compile_context>

<pallas_src>
import functools

import jax
import jax.numpy as jnp
from jax.experimental import pallas as pl
from jax.experimental.pallas import tpu as pltpu

LANE = 128
FUSED_MAX_N = 512                       # padded-N threshold for the fused path
LARGE_TILE = 512                        # tm = tk for the tiled path
RESIDENT_FEAT_MAX_BYTES = 8 * 1024 * 1024  # budget for a resident feat block
VMEM_LIMIT = 32 * 1024 * 1024


def _round_up(a: int, b: int) -> int:
    return (a + b - 1) // b * b


def _pad2d(a, rows, cols, dtype):
    a = a.astype(dtype)
    return jnp.pad(a, ((0, rows - a.shape[0]), (0, cols - a.shape[1])))


# ---------------------------------------------------------------------------
# Small-N fast path: both GCN layers fused in a single VMEM-resident kernel.
# ---------------------------------------------------------------------------
def _fused_kernel(adj_ref, x_ref, w1_ref, b1_ref, w2_ref, b2_ref, out_ref):
    adj = adj_ref[...]
    s1 = jnp.dot(x_ref[...], w1_ref[...], preferred_element_type=jnp.float32)
    h = jnp.maximum(
        jnp.dot(adj, s1, preferred_element_type=jnp.float32) + b1_ref[...], 0.0)
    # TODO(synk): F.dropout(h, p, training=True) not implemented (eval identity).
    s2 = jnp.dot(h, w2_ref[...], preferred_element_type=jnp.float32)
    out_ref[...] = jnp.maximum(
        jnp.dot(adj, s2, preferred_element_type=jnp.float32) + b2_ref[...], 0.0)


def _fused_decoder(x, adj, w1, b1, w2, b2, n_pad, f_hid, f_out):
    adj_p = _pad2d(adj, n_pad, n_pad, jnp.float32)
    x_p = _pad2d(x, n_pad, f_hid, jnp.float32)
    w1_p = _pad2d(w1, f_hid, f_hid, jnp.float32)
    b1_p = _pad2d(b1, 1, f_hid, jnp.float32)
    w2_p = _pad2d(w2, f_hid, f_out, jnp.float32)
    b2_p = _pad2d(b2, 1, f_out, jnp.float32)
    return pl.pallas_call(
        _fused_kernel,
        out_shape=jax.ShapeDtypeStruct((n_pad, f_out), jnp.float32),
        compiler_params=pltpu.CompilerParams(vmem_limit_bytes=VMEM_LIMIT),
    )(adj_p, x_p, w1_p, b1_p, w2_p, b2_p)


# ---------------------------------------------------------------------------
# Large-graph path: one row/K-tiled pallas_call per GCN layer.
#   relu((adj @ feat) @ W + b), grid = (rows "parallel", K "arbitrary"),
#   resident f32 accumulator, resident 128-lane feat (fetched once).
# ---------------------------------------------------------------------------
def _gcn_layer_kernel(adj_ref, feat_ref, w_ref, b_ref, out_ref, acc_ref, *,
                      feat_resident, tk):
    k = pl.program_id(1)

    @pl.when(k == 0)
    def _():
        acc_ref[...] = jnp.zeros_like(acc_ref)

    if feat_resident:
        # Full [n_pad, f_in] feat block lives in VMEM; slice the K chunk.
        start = pl.multiple_of(k * tk, tk)
        feat = feat_ref[pl.ds(start, tk), :]
    else:
        feat = feat_ref[...]

    # Long N-contraction: bf16 operands, f32 accumulation, 128-lane output.
    acc_ref[...] += jnp.dot(adj_ref[...], feat,
                            preferred_element_type=jnp.float32)

    @pl.when(k == pl.num_programs(1) - 1)
    def _():
        # Tiny projection on the resident f32 accumulator (no bf16 recast),
        # bias add + ReLU in f32, lane-dense store.
        proj = jnp.dot(acc_ref[...], w_ref[...],
                       preferred_element_type=jnp.float32)
        out_ref[...] = jnp.maximum(proj + b_ref[...], 0.0).astype(out_ref.dtype)


def _gcn_layer(adj_p, feat_p, w_p, b_p, *, out_dtype, tm, tk):
    """relu((adj_p @ feat_p) @ w_p + b_p), row/K-tiled.

    adj_p:  [Np, Np]   bf16
    feat_p: [Np, Fin]  bf16  (Fin multiple of 128)
    w_p:    [Fin, Fout] f32  (Fout multiple of 128)
    b_p:    [1, Fout]  f32
    """
    n_pad = adj_p.shape[0]
    f_in = feat_p.shape[1]
    f_out = w_p.shape[1]
    grid = (n_pad // tm, n_pad // tk)

    feat_bytes = feat_p.size * feat_p.dtype.itemsize
    feat_resident = feat_bytes <= RESIDENT_FEAT_MAX_BYTES

    if feat_resident:
        feat_spec = pl.BlockSpec((n_pad, f_in), lambda i, k: (0, 0))
        feat_hbm_bytes = feat_bytes                      # fetched once
    else:
        feat_spec = pl.BlockSpec((tk, f_in), lambda i, k: (k, 0))
        feat_hbm_bytes = feat_bytes * (n_pad // tm)      # re-streamed per row

    flops = 2 * n_pad * n_pad * f_in + 2 * n_pad * f_in * f_out
    bytes_accessed = (adj_p.size * adj_p.dtype.itemsize
                      + feat_hbm_bytes
                      + w_p.size * 4 + b_p.size * 4
                      + n_pad * f_out * jnp.dtype(out_dtype).itemsize)

    kernel = functools.partial(_gcn_layer_kernel,
                               feat_resident=feat_resident, tk=tk)

    return pl.pallas_call(
        kernel,
        out_shape=jax.ShapeDtypeStruct((n_pad, f_out), out_dtype),
        grid_spec=pltpu.PrefetchScalarGridSpec(
            num_scalar_prefetch=0,
            grid=grid,
            in_specs=[
                pl.BlockSpec((tm, tk), lambda i, k: (i, k)),       # adj tile
                feat_spec,                                          # feat
                pl.BlockSpec((f_in, f_out), lambda i, k: (0, 0)),  # weights
                pl.BlockSpec((1, f_out), lambda i, k: (0, 0)),     # bias
            ],
            out_specs=pl.BlockSpec((tm, f_out), lambda i, k: (i, 0)),
            scratch_shapes=[pltpu.VMEM((tm, f_in), jnp.float32)],
        ),
        compiler_params=pltpu.CompilerParams(
            dimension_semantics=("parallel", "arbitrary"),
            vmem_limit_bytes=VMEM_LIMIT,
        ),
        cost_estimate=pl.CostEstimate(
            flops=flops, transcendentals=0, bytes_accessed=bytes_accessed),
    )(adj_p, feat_p, w_p, b_p)


@jax.jit
def attribute_decoder(x, adj, w1, b1, w2, b2):
    """x: [N, nhid], adj: [N, N], w1: [nhid, nhid], b1: [1, nhid],
    w2: [nhid, nfeat], b2: [1, nfeat]  ->  [N, nfeat] (float32)."""
    n, nhid = x.shape
    nfeat = w2.shape[1]

    f_hid = _round_up(nhid, LANE)
    f_out = _round_up(nfeat, LANE)

    # Small/medium graphs: single fused, fully VMEM-resident kernel (f32).
    n_small = _round_up(n, LANE)
    if n_small <= FUSED_MAX_N:
        out = _fused_decoder(x, adj, w1, b1, w2, b2, n_small, f_hid, f_out)
        return out[:n, :nfeat]

    # Large graphs: unconditional big tiles. Padding to 512 with the >512
    # threshold guarantees >= 2 row tiles (both v7x TensorCores busy).
    n_pad = _round_up(n, LARGE_TILE)
    tm = tk = LARGE_TILE

    adj_p = _pad2d(adj, n_pad, n_pad, jnp.bfloat16)   # dominant HBM stream
    x_p = _pad2d(x, n_pad, f_hid, jnp.bfloat16)
    w1_p = _pad2d(w1, f_hid, f_hid, jnp.float32)
    b1_p = _pad2d(b1, 1, f_hid, jnp.float32)
    w2_p = _pad2d(w2, f_hid, f_out, jnp.float32)
    b2_p = _pad2d(b2, 1, f_out, jnp.float32)

    # Layer 1: relu((adj @ x) @ W1 + b1)   (associativity of matmul)
    h = _gcn_layer(adj_p, x_p, w1_p, b1_p, out_dtype=jnp.bfloat16, tm=tm, tk=tk)
    # TODO(synk): training-mode dropout not implemented (eval-mode identity).
    # Layer 2: relu((adj @ h) @ W2 + b2)
    out = _gcn_layer(adj_p, h, w2_p, b2_p, out_dtype=jnp.float32, tm=tm, tk=tk)
    return out[:n, :nfeat]


# ---------------------------------------------------------------------------
# Reference + test harness
# ---------------------------------------------------------------------------
def _reference(x, adj, w1, b1, w2, b2):
    h = jnp.maximum(adj @ (x @ w1) + b1, 0.0)
    return jnp.maximum(adj @ (h @ w2) + b2, 0.0)


def _make_inputs(key, n, nhid, nfeat):
    kx, kadj, kw1, kb1, kw2, kb2 = jax.random.split(key, 6)
    x = jax.random.normal(kx, (n, nhid), dtype=jnp.float32)
    # Symmetric, row-normalised adjacency (typical GCN preprocessing).
    a = jax.random.uniform(kadj, (n, n), dtype=jnp.float32)
    a = (a + a.T) * 0.5 + jnp.eye(n, dtype=jnp.float32)
    adj = a / jnp.sum(a, axis=1, keepdims=True)
    s1 = 1.0 / jnp.sqrt(jnp.float32(nhid))
    w1 = jax.random.uniform(kw1, (nhid, nhid), jnp.float32, -s1, s1)
    b1 = jax.random.uniform(kb1, (1, nhid), jnp.float32, -s1, s1)
    s2 = 1.0 / jnp.sqrt(jnp.float32(nfeat))
    w2 = jax.random.uniform(kw2, (nhid, nfeat), jnp.float32, -s2, s2)
    b2 = jax.random.uniform(kb2, (1, nfeat), jnp.float32, -s2, s2)
    return x, adj, w1, b1, w2, b2


if __name__ == "__main__":
    # Module's actual small shapes: N nodes, hidden nhid, output nfeat.
    N, nhid, nfeat = 16, 32, 8

    args = _make_inputs(jax.random.PRNGKey(0), N, nhid, nfeat)
    out = jax.block_until_ready(attribute_decoder(*args))
    ref = _reference(*args)
    assert out.shape == (N, nfeat)
    err = float(jnp.max(jnp.abs(out - ref)))
    assert jnp.allclose(out, ref, atol=2e-2, rtol=2e-2), f"max abs err {err}"

    # Larger graph: exercises the row/K-tiled path (resident feat, 512 tiles).
    N2 = 700
    args2 = _make_inputs(jax.random.PRNGKey(1), N2, nhid, nfeat)
    out2 = jax.block_until_ready(attribute_decoder(*args2))
    ref2 = _reference(*args2)
    assert out2.shape == (N2, nfeat)
    err2 = float(jnp.max(jnp.abs(out2 - ref2)))
    assert jnp.allclose(out2, ref2, atol=2e-2, rtol=2e-2), f"max abs err {err2}"

    print("KERNEL_OK")
</pallas_src>

<mosaic_0001>
module attributes {stable_mosaic.version = 11 : i64} {
  func.func @_fused_kernel(%arg0: memref<128x128xf32, #tpu.memory_space<vmem>>, %arg1: memref<128x128xf32, #tpu.memory_space<vmem>>, %arg2: memref<128x128xf32, #tpu.memory_space<vmem>>, %arg3: memref<1x128xf32, #tpu.memory_space<vmem>>, %arg4: memref<128x128xf32, #tpu.memory_space<vmem>>, %arg5: memref<1x128xf32, #tpu.memory_space<vmem>>, %arg6: memref<128x128xf32, #tpu.memory_space<vmem>>) attributes {dimension_semantics = [], scalar_prefetch = 0 : i64, scratch_operands = 0 : i64, tpu.core_type = #tpu.core_type<tc>} {
    %c0 = arith.constant 0 : index
    %c0_0 = arith.constant 0 : index
    %0 = vector.load %arg0[%c0, %c0_0] : memref<128x128xf32, #tpu.memory_space<vmem>>, vector<128x128xf32>
    %c0_1 = arith.constant 0 : index
    %c0_2 = arith.constant 0 : index
    %1 = vector.load %arg1[%c0_1, %c0_2] : memref<128x128xf32, #tpu.memory_space<vmem>>, vector<128x128xf32>
    %c0_3 = arith.constant 0 : index
    %c0_4 = arith.constant 0 : index
    %2 = vector.load %arg2[%c0_3, %c0_4] : memref<128x128xf32, #tpu.memory_space<vmem>>, vector<128x128xf32>
    %cst = arith.constant dense<0.000000e+00> : vector<128x128xf32>
    %3 = tpu.matmul %1, %2, %cst {dimension_numbers = #tpu.dot_dimension_numbers<[1], [0], [0], [1], [0, 0, 1, 1], [], []>} : vector<128x128xf32>, vector<128x128xf32>, vector<128x128xf32> -> vector<128x128xf32>
    %cst_5 = arith.constant dense<0.000000e+00> : vector<128x128xf32>
    %4 = tpu.matmul %0, %3, %cst_5 {dimension_numbers = #tpu.dot_dimension_numbers<[1], [0], [0], [1], [0, 0, 1, 1], [], []>} : vector<128x128xf32>, vector<128x128xf32>, vector<128x128xf32> -> vector<128x128xf32>
    %c0_6 = arith.constant 0 : index
    %c0_7 = arith.constant 0 : index
    %5 = vector.load %arg3[%c0_6, %c0_7] : memref<1x128xf32, #tpu.memory_space<vmem>>, vector<1x128xf32>
    %6 = vector.broadcast %5 : vector<1x128xf32> to vector<128x128xf32>
    %7 = arith.addf %4, %6 : vector<128x128xf32>
    %cst_8 = arith.constant 0.000000e+00 : f32
    %8 = vector.broadcast %cst_8 : f32 to vector<128x128xf32>
    %9 = arith.maximumf %7, %8 : vector<128x128xf32>
    %c0_9 = arith.constant 0 : index
    %c0_10 = arith.constant 0 : index
    %10 = vector.load %arg4[%c0_9, %c0_10] : memref<128x128xf32, #tpu.memory_space<vmem>>, vector<128x128xf32>
    %cst_11 = arith.constant dense<0.000000e+00> : vector<128x128xf32>
    %11 = tpu.matmul %9, %10, %cst_11 {dimension_numbers = #tpu.dot_dimension_numbers<[1], [0], [0], [1], [0, 0, 1, 1], [], []>} : vector<128x128xf32>, vector<128x128xf32>, vector<128x128xf32> -> vector<128x128xf32>
    %cst_12 = arith.constant dense<0.000000e+00> : vector<128x128xf32>
    %12 = tpu.matmul %0, %11, %cst_12 {dimension_numbers = #tpu.dot_dimension_numbers<[1], [0], [0], [1], [0, 0, 1, 1], [], []>} : vector<128x128xf32>, vector<128x128xf32>, vector<128x128xf32> -> vector<128x128xf32>
    %c0_13 = arith.constant 0 : index
    %c0_14 = arith.constant 0 : index
    %13 = vector.load %arg5[%c0_13, %c0_14] : memref<1x128xf32, #tpu.memory_space<vmem>>, vector<1x128xf32>
    %14 = vector.broadcast %13 : vector<1x128xf32> to vector<128x128xf32>
    %15 = arith.addf %12, %14 : vector<128x128xf32>
    %cst_15 = arith.constant 0.000000e+00 : f32
    %16 = vector.broadcast %cst_15 : f32 to vector<128x128xf32>
    %17 = arith.maximumf %15, %16 : vector<128x128xf32>
    %c0_16 = arith.constant 0 : index
    %c0_17 = arith.constant 0 : index
    %18 = vector.load %arg6[%c0_16, %c0_17] : memref<128x128xf32, #tpu.memory_space<vmem>>, vector<128x128xf32>
    tpu.vector_store %arg6[%c0_16, %c0_17], %17 {strides = array<i32>} : memref<128x128xf32, #tpu.memory_space<vmem>>, vector<128x128xf32>,
    return
  }
}

</mosaic_0001>

<llo_original>
// kernel: attribute_decoder.1
$region0: #{attribute_decoder.1}
  #allocation0 [shape = 'u32[]', space=smem, size = 0x4, offset = 0x4, fixed_abs, tag = 'smem constant byte address 0x4 - core index']
  #allocation1 [shape = 'u32[144,128]{1,0:T(1,128)}', space=vmem, size = 0x12000, scoped, tag = 'internal scratch']
  %s0 = inlined_call_operand.vmem [shape: f32[128,128], index: 0, kind: input, shape index: {}]
  %s1 = inlined_call_operand.vmem [shape: f32[128,128], index: 1, kind: input, shape index: {}]
  %s2 = inlined_call_operand.vmem [shape: f32[128,128], index: 2, kind: input, shape index: {}]
  %s3 = inlined_call_operand.vmem [shape: f32[1,128], index: 3, kind: input, shape index: {}]
  %s4 = inlined_call_operand.vmem [shape: f32[128,128], index: 4, kind: input, shape index: {}]
  %s5 = inlined_call_operand.vmem [shape: f32[1,128], index: 5, kind: input, shape index: {}]
  %s6 = inlined_call_operand.vmem [shape: f32[128,128], index: 6, kind: output, shape index: {}]
  %s7 = sld [smem:[#allocation0]]
  $region34: #{attribute_decoder.1} parent=0
    _
  %s9 = ssub.s32 1, %s7
  %s10 = scalar_select 0, %s9, %s7
  // Predicated region
  $region2: #{attribute_decoder.1} parent=0 // pred_check
    _
  $region3: #{attribute_decoder.1} parent=0 // pred_check_branch
    %12 = sbr.rel (0) target = $region5
  $region4: #{attribute_decoder.1} parent=0 // pred_region
    _
  $region5: #{attribute_decoder.1} parent=0 // pred_fallthru
    _
  // Predicated region
  $region6: #{attribute_decoder.1} parent=0 // pred_check
    _
  $region7: #{attribute_decoder.1} parent=0 // pred_check_branch
    %14 = sbr.rel (0) target = $region9
  $region8: #{attribute_decoder.1} parent=0 // pred_region
    _
  $region9: #{attribute_decoder.1} parent=0 // pred_fallthru
    _
  // Predicated region
  $region10: #{attribute_decoder.1} parent=0 // pred_check
    _
  $region11: #{attribute_decoder.1} parent=0 // pred_check_branch
    %16 = sbr.rel (0) target = $region13
  $region12: #{attribute_decoder.1} parent=0 // pred_region
    _
  $region13: #{attribute_decoder.1} parent=0 // pred_fallthru
    _
  // Predicated region
  $region14: #{attribute_decoder.1} parent=0 // pred_check
    _
  $region15: #{attribute_decoder.1} parent=0 // pred_check_branch
    %18 = sbr.rel (0) target = $region17
  $region16: #{attribute_decoder.1} parent=0 // pred_region
    _
  $region17: #{attribute_decoder.1} parent=0 // pred_fallthru
    _
  // Predicated region
  $region18: #{attribute_decoder.1} parent=0 // pred_check
    _
  $region19: #{attribute_decoder.1} parent=0 // pred_check_branch
    %20 = sbr.rel (0) target = $region21
  $region20: #{attribute_decoder.1} parent=0 // pred_region
    _
  $region21: #{attribute_decoder.1} parent=0 // pred_fallthru
    _
  // Predicated region
  $region22: #{attribute_decoder.1} parent=0 // pred_check
    _
  $region23: #{attribute_decoder.1} parent=0 // pred_check_branch
    %22 = sbr.rel (0) target = $region25
  $region24: #{attribute_decoder.1} parent=0 // pred_region
    _
  $region25: #{attribute_decoder.1} parent=0 // pred_fallthru
    _
  %v23 = vld [vmem:[%s0] sm:$0xff]
  %v24 = vld [vmem:[%s0 + $0x8] sm:$0xff]
  %v25 = vld [vmem:[%s0 + $0x10] sm:$0xff]
  %v26 = vld [vmem:[%s0 + $0x18] sm:$0xff]
  %v27 = vld [vmem:[%s0 + $0x20] sm:$0xff]
  %v28 = vld [vmem:[%s0 + $0x28] sm:$0xff]
  %v29 = vld [vmem:[%s0 + $0x30] sm:$0xff]
  %v30 = vld [vmem:[%s0 + $0x38] sm:$0xff]
  %v31 = vld [vmem:[%s0 + $0x40] sm:$0xff]
  %v32 = vld [vmem:[%s0 + $0x48] sm:$0xff]
  %v33 = vld [vmem:[%s0 + $0x50] sm:$0xff]
  %v34 = vld [vmem:[%s0 + $0x58] sm:$0xff]
  %v35 = vld [vmem:[%s0 + $0x60] sm:$0xff]
  %v36 = vld [vmem:[%s0 + $0x68] sm:$0xff]
  %v37 = vld [vmem:[%s0 + $0x70] sm:$0xff]
  %v38 = vld [vmem:[%s0 + $0x78] sm:$0xff]
  %v39 = vld [vmem:[%s1] sm:$0xff]
  %v40 = vld [vmem:[%s1 + $0x8] sm:$0xff]
  %v41 = vld [vmem:[%s1 + $0x10] sm:$0xff]
  %v42 = vld [vmem:[%s1 + $0x18] sm:$0xff]
  %v43 = vld [vmem:[%s1 + $0x20] sm:$0xff]
  %v44 = vld [vmem:[%s1 + $0x28] sm:$0xff]
  %v45 = vld [vmem:[%s1 + $0x30] sm:$0xff]
  %v46 = vld [vmem:[%s1 + $0x38] sm:$0xff]
  %v47 = vld [vmem:[%s1 + $0x40] sm:$0xff]
  %v48 = vld [vmem:[%s1 + $0x48] sm:$0xff]
  %v49 = vld [vmem:[%s1 + $0x50] sm:$0xff]
  %v50 = vld [vmem:[%s1 + $0x58] sm:$0xff]
  %v51 = vld [vmem:[%s1 + $0x60] sm:$0xff]
  %v52 = vld [vmem:[%s1 + $0x68] sm:$0xff]
  %v53 = vld [vmem:[%s1 + $0x70] sm:$0xff]
  %v54 = vld [vmem:[%s1 + $0x78] sm:$0xff]
  %v55 = vld [vmem:[%s2] sm:$0xff]
  %v56 = vld [vmem:[%s2 + $0x8] sm:$0xff]
  %v57 = vld [vmem:[%s2 + $0x10] sm:$0xff]
  %v58 = vld [vmem:[%s2 + $0x18] sm:$0xff]
  %v59 = vld [vmem:[%s2 + $0x20] sm:$0xff]
  %v60 = vld [vmem:[%s2 + $0x28] sm:$0xff]
  %v61 = vld [vmem:[%s2 + $0x30] sm:$0xff]
  %v62 = vld [vmem:[%s2 + $0x38] sm:$0xff]
  %v63 = vld [vmem:[%s2 + $0x40] sm:$0xff]
  %v64 = vld [vmem:[%s2 + $0x48] sm:$0xff]
  %v65 = vld [vmem:[%s2 + $0x50] sm:$0xff]
  %v66 = vld [vmem:[%s2 + $0x58] sm:$0xff]
  %v67 = vld [vmem:[%s2 + $0x60] sm:$0xff]
  %v68 = vld [vmem:[%s2 + $0x68] sm:$0xff]
  %v69 = vld [vmem:[%s2 + $0x70] sm:$0xff]
  %v70 = vld [vmem:[%s2 + $0x78] sm:$0xff]
  %71 = vmatprep.subr.mxu0 0.0
  %72 = vmatpush1.msra.mxu0 %v70
  %73 = vmatprep.subr.mxu0 0.0
  %74 = vmatpush1.msra.mxu0 %v69
  %75 = vmatprep.subr.mxu0 0.0
  %76 = vmatpush1.msra.mxu0 %v68
  %77 = vmatprep.subr.mxu0 0.0
  %78 = vmatpush1.msra.mxu0 %v67
  %79 = vmatprep.subr.mxu0 0.0
  %80 = vmatpush1.msra.mxu0 %v66
  %81 = vmatprep.subr.mxu0 0.0
  %82 = vmatpush1.msra.mxu0 %v65
  %83 = vmatprep.subr.mxu0 0.0
  %84 = vmatpush1.msra.mxu0 %v64
  %85 = vmatprep.subr.mxu0 0.0
  %86 = vmatpush1.msra.mxu0 %v63
  %87 = vmatprep.subr.mxu0 0.0
  %88 = vmatpush1.msra.mxu0 %v62
  %89 = vmatprep.subr.mxu0 0.0
  %90 = vmatpush1.msra.mxu0 %v61
  %91 = vmatprep.subr.mxu0 0.0
  %92 = vmatpush1.msra.mxu0 %v60
  %93 = vmatprep.subr.mxu0 0.0
  %94 = vmatpush1.msra.mxu0 %v59
  %95 = vmatprep.subr.mxu0 0.0
  %96 = vmatpush1.msra.mxu0 %v58
  %97 = vmatprep.subr.mxu0 0.0
  %98 = vmatpush1.msra.mxu0 %v57
  %99 = vmatprep.subr.mxu0 0.0
  %100 = vmatpush1.msra.mxu0 %v56
  %101 = vmatprep.subr.mxu0 0.0
  %102 = vmatpush1.msra.mxu0 %v55
  %103 = vmatprep.subr.mxu0 0.0
  %104 = vmatpush2.msra.mxu0 0.0
  %105 = vmatprep.subr.mxu0 0.0
  %106 = vmatpush2.msra.mxu0 0.0
  %107 = vmatprep.subr.mxu0 0.0
  %108 = vmatpush2.msra.mxu0 0.0
  %109 = vmatprep.subr.mxu0 0.0
  %110 = vmatpush2.msra.mxu0 0.0
  %111 = vmatprep.subr.mxu0 0.0
  %112 = vmatpush2.msra.mxu0 0.0
  %113 = vmatprep.subr.mxu0 0.0
  %114 = vmatpush2.msra.mxu0 0.0
  %115 = vmatprep.subr.mxu0 0.0
  %116 = vmatpush2.msra.mxu0 0.0
  %117 = vmatprep.subr.mxu0 0.0
  %118 = vmatpush2.msra.mxu0 0.0
  %119 = vmatprep.subr.mxu0 0.0
  %120 = vmatpush2.msra.mxu0 0.0
  %121 = vmatprep.subr.mxu0 0.0
  %122 = vmatpush2.msra.mxu0 0.0
  %123 = vmatprep.subr.mxu0 0.0
  %124 = vmatpush2.msra.mxu0 0.0
  %125 = vmatprep.subr.mxu0 0.0
  %126 = vmatpush2.msra.mxu0 0.0
  %127 = vmatprep.subr.mxu0 0.0
  %128 = vmatpush2.msra.mxu0 0.0
  %129 = vmatprep.subr.mxu0 0.0
  %130 = vmatpush2.msra.mxu0 0.0
  %131 = vmatprep.subr.mxu0 0.0
  %132 = vmatpush2.msra.mxu0 0.0
  %133 = vmatprep.subr.mxu0 0.0
  %134 = vmatpush2.msra.mxu0 0.0
  %135 = vmatprep.mubr.f32.mxu0 0.0
  %136 = vmatmul.mubr.f32.gmra.mxu0 %v39
  %v137 = vpop.f32.mrf.mxu0
  %v138 = vadd.f32 0.0, %v137
  %v139 = vpop.f32.mrf.mxu0
  %140 = vmatprep.mubr.f32.mxu0 0.0
  %141 = vmatmul.mubr.f32.gmra.mxu0 %v40
  %v142 = vpop.f32.mrf.mxu0
  %v143 = vadd.f32 0.0, %v142
  %v144 = vpop.f32.mrf.mxu0
  %145 = vmatprep.mubr.f32.mxu0 0.0
  %146 = vmatmul.mubr.f32.gmra.mxu0 %v41
  %v147 = vpop.f32.mrf.mxu0
  %v148 = vadd.f32 0.0, %v147
  %v149 = vpop.f32.mrf.mxu0
  %150 = vmatprep.mubr.f32.mxu0 0.0
  %151 = vmatmul.mubr.f32.gmra.mxu0 %v42
  %v152 = vpop.f32.mrf.mxu0
  %v153 = vadd.f32 0.0, %v152
  %v154 = vpop.f32.mrf.mxu0
  %155 = vmatprep.mubr.f32.mxu0 0.0
  %156 = vmatmul.mubr.f32.gmra.mxu0 %v43
  %v157 = vpop.f32.mrf.mxu0
  %v158 = vadd.f32 0.0, %v157
  %v159 = vpop.f32.mrf.mxu0
  %160 = vmatprep.mubr.f32.mxu0 0.0
  %161 = vmatmul.mubr.f32.gmra.mxu0 %v44
  %v162 = vpop.f32.mrf.mxu0
  %v163 = vadd.f32 0.0, %v162
  %v164 = vpop.f32.mrf.mxu0
  %165 = vmatprep.mubr.f32.mxu0 0.0
  %166 = vmatmul.mubr.f32.gmra.mxu0 %v45
  %v167 = vpop.f32.mrf.mxu0
  %v168 = vadd.f32 0.0, %v167
  %v169 = vpop.f32.mrf.mxu0
  %170 = vmatprep.mubr.f32.mxu0 0.0
  %171 = vmatmul.mubr.f32.gmra.mxu0 %v46
  %v172 = vpop.f32.mrf.mxu0
  %v173 = vadd.f32 0.0, %v172
  %v174 = vpop.f32.mrf.mxu0
  %175 = vmatprep.mubr.f32.mxu0 0.0
  %176 = vmatmul.mubr.f32.gmra.mxu0 %v47
  %v177 = vpop.f32.mrf.mxu0
  %v178 = vadd.f32 0.0, %v177
  %v179 = vpop.f32.mrf.mxu0
  %180 = vmatprep.mubr.f32.mxu0 0.0
  %181 = vmatmul.mubr.f32.gmra.mxu0 %v48
  %v182 = vpop.f32.mrf.mxu0
  %v183 = vadd.f32 0.0, %v182
  %v184 = vpop.f32.mrf.mxu0
  %185 = vmatprep.mubr.f32.mxu0 0.0
  %186 = vmatmul.mubr.f32.gmra.mxu0 %v49
  %v187 = vpop.f32.mrf.mxu0
  %v188 = vadd.f32 0.0, %v187
  %v189 = vpop.f32.mrf.mxu0
  %190 = vmatprep.mubr.f32.mxu0 0.0
  %191 = vmatmul.mubr.f32.gmra.mxu0 %v50
  %v192 = vpop.f32.mrf.mxu0
  %v193 = vadd.f32 0.0, %v192
  %v194 = vpop.f32.mrf.mxu0
  %195 = vmatprep.mubr.f32.mxu0 0.0
  %196 = vmatmul.mubr.f32.gmra.mxu0 %v51
  %v197 = vpop.f32.mrf.mxu0
  %v198 = vadd.f32 0.0, %v197
  %v199 = vpop.f32.mrf.mxu0
  %200 = vmatprep.mubr.f32.mxu0 0.0
  %201 = vmatmul.mubr.f32.gmra.mxu0 %v52
  %v202 = vpop.f32.mrf.mxu0
  %v203 = vadd.f32 0.0, %v202
  %v204 = vpop.f32.mrf.mxu0
  %205 = vmatprep.mubr.f32.mxu0 0.0
  %206 = vmatmul.mubr.f32.gmra.mxu0 %v53
  %v207 = vpop.f32.mrf.mxu0
  %v208 = vadd.f32 0.0, %v207
  %v209 = vpop.f32.mrf.mxu0
  %210 = vmatprep.mubr.f32.mxu0 0.0
  %211 = vmatmul.mubr.f32.gmra.mxu0 %v54
  %v212 = vpop.f32.mrf.mxu0
  %v213 = vadd.f32 0.0, %v212
  %v214 = vpop.f32.mrf.mxu0
  %215 = vdwg.mxu0
  %v216 = vld [vmem:[%s3] sm:$0x1]
  %v218 = vlaneseq
  %v219 = vshrl.u32 %v218, 7
  %v220 = vsub.s32 0, %v219
  %v221 = vrot.slane %v216, %v220
  %223 = vmatprep.subr.mxu0 0.0
  %224 = vmatpush1.msra.mxu0 %v213
  %225 = vmatprep.subr.mxu0 0.0
  %226 = vmatpush1.msra.mxu0 %v208
  %227 = vmatprep.subr.mxu0 0.0
  %228 = vmatpush1.msra.mxu0 %v203
  %229 = vmatprep.subr.mxu0 0.0
  %230 = vmatpush1.msra.mxu0 %v198
  %231 = vmatprep.subr.mxu0 0.0
  %232 = vmatpush1.msra.mxu0 %v193
  %233 = vmatprep.subr.mxu0 0.0
  %234 = vmatpush1.msra.mxu0 %v188
  %235 = vmatprep.subr.mxu0 0.0
  %236 = vmatpush1.msra.mxu0 %v183
  %237 = vmatprep.subr.mxu0 0.0
  %238 = vmatpush1.msra.mxu0 %v178
  %239 = vmatprep.subr.mxu0 0.0
  %240 = vmatpush1.msra.mxu0 %v173
  %241 = vmatprep.subr.mxu0 0.0
  %242 = vmatpush1.msra.mxu0 %v168
  %243 = vmatprep.subr.mxu0 0.0
  %244 = vmatpush1.msra.mxu0 %v163
  %245 = vmatprep.subr.mxu0 0.0
  %246 = vmatpush1.msra.mxu0 %v158
  %247 = vmatprep.subr.mxu0 0.0
  %248 = vmatpush1.msra.mxu0 %v153
  %249 = vmatprep.subr.mxu0 0.0
  %250 = vmatpush1.msra.mxu0 %v148
  %251 = vmatprep.subr.mxu0 0.0
  %252 = vmatpush1.msra.mxu0 %v143
  %253 = vmatprep.subr.mxu0 0.0
  %254 = vmatpush1.msra.mxu0 %v138
  %255 = vmatprep.subr.mxu0 0.0
  %256 = vmatpush2.msra.mxu0 0.0
  %257 = vmatprep.subr.mxu0 0.0
  %258 = vmatpush2.msra.mxu0 0.0
  %259 = vmatprep.subr.mxu0 0.0
  %260 = vmatpush2.msra.mxu0 0.0
  %261 = vmatprep.subr.mxu0 0.0
  %262 = vmatpush2.msra.mxu0 0.0
  %263 = vmatprep.subr.mxu0 0.0
  %264 = vmatpush2.msra.mxu0 0.0
  %265 = vmatprep.subr.mxu0 0.0
  %266 = vmatpush2.msra.mxu0 0.0
  %267 = vmatprep.subr.mxu0 0.0
  %268 = vmatpush2.msra.mxu0 0.0
  %269 = vmatprep.subr.mxu0 0.0
  %270 = vmatpush2.msra.mxu0 0.0
  %271 = vmatprep.subr.mxu0 0.0
  %272 = vmatpush2.msra.mxu0 0.0
  %273 = vmatprep.subr.mxu0 0.0
  %274 = vmatpush2.msra.mxu0 0.0
  %275 = vmatprep.subr.mxu0 0.0
  %276 = vmatpush2.msra.mxu0 0.0
  %277 = vmatprep.subr.mxu0 0.0
  %278 = vmatpush2.msra.mxu0 0.0
  %279 = vmatprep.subr.mxu0 0.0
  %280 = vmatpush2.msra.mxu0 0.0
  %281 = vmatprep.subr.mxu0 0.0
  %282 = vmatpush2.msra.mxu0 0.0
  %283 = vmatprep.subr.mxu0 0.0
  %284 = vmatpush2.msra.mxu0 0.0
  %285 = vmatprep.subr.mxu0 0.0
  %286 = vmatpush2.msra.mxu0 0.0
  %287 = vmatprep.mubr.f32.mxu0 0.0
  %288 = vmatmul.mubr.f32.gmra.mxu0 %v23
  %v289 = vpop.f32.mrf.mxu0
  %v290 = vadd.f32 %v221, %v289
  %v291 = vpop.f32.mrf.mxu0
  %292 = vmatprep.mubr.f32.mxu0 0.0
  %293 = vmatmul.mubr.f32.gmra.mxu0 %v24
  %v294 = vpop.f32.mrf.mxu0
  %v295 = vadd.f32 %v221, %v294
  %v296 = vpop.f32.mrf.mxu0
  %297 = vmatprep.mubr.f32.mxu0 0.0
  %298 = vmatmul.mubr.f32.gmra.mxu0 %v25
  %v299 = vpop.f32.mrf.mxu0
  %v300 = vadd.f32 %v221, %v299
  %v301 = vpop.f32.mrf.mxu0
  %302 = vmatprep.mubr.f32.mxu0 0.0
  %303 = vmatmul.mubr.f32.gmra.mxu0 %v26
  %v304 = vpop.f32.mrf.mxu0
  %v305 = vadd.f32 %v221, %v304
  %v306 = vpop.f32.mrf.mxu0
  %307 = vmatprep.mubr.f32.mxu0 0.0
  %308 = vmatmul.mubr.f32.gmra.mxu0 %v27
  %v309 = vpop.f32.mrf.mxu0
  %v310 = vadd.f32 %v221, %v309
  %v311 = vpop.f32.mrf.mxu0
  %312 = vmatprep.mubr.f32.mxu0 0.0
  %313 = vmatmul.mubr.f32.gmra.mxu0 %v28
  %v314 = vpop.f32.mrf.mxu0
  %v315 = vadd.f32 %v221, %v314
  %v316 = vpop.f32.mrf.mxu0
  %317 = vmatprep.mubr.f32.mxu0 0.0
  %318 = vmatmul.mubr.f32.gmra.mxu0 %v29
  %v319 = vpop.f32.mrf.mxu0
  %v320 = vadd.f32 %v221, %v319
  %v321 = vpop.f32.mrf.mxu0
  %322 = vmatprep.mubr.f32.mxu0 0.0
  %323 = vmatmul.mubr.f32.gmra.mxu0 %v30
  %v324 = vpop.f32.mrf.mxu0
  %v325 = vadd.f32 %v221, %v324
  %v326 = vpop.f32.mrf.mxu0
  %327 = vmatprep.mubr.f32.mxu0 0.0
  %328 = vmatmul.mubr.f32.gmra.mxu0 %v31
  %v329 = vpop.f32.mrf.mxu0
  %v330 = vadd.f32 %v221, %v329
  %v331 = vpop.f32.mrf.mxu0
  %332 = vmatprep.mubr.f32.mxu0 0.0
  %333 = vmatmul.mubr.f32.gmra.mxu0 %v32
  %v334 = vpop.f32.mrf.mxu0
  %v335 = vadd.f32 %v221, %v334
  %v336 = vpop.f32.mrf.mxu0
  %337 = vmatprep.mubr.f32.mxu0 0.0
  %338 = vmatmul.mubr.f32.gmra.mxu0 %v33
  %v339 = vpop.f32.mrf.mxu0
  %v340 = vadd.f32 %v221, %v339
  %v341 = vpop.f32.mrf.mxu0
  %342 = vmatprep.mubr.f32.mxu0 0.0
  %343 = vmatmul.mubr.f32.gmra.mxu0 %v34
  %v344 = vpop.f32.mrf.mxu0
  %v345 = vadd.f32 %v221, %v344
  %v346 = vpop.f32.mrf.mxu0
  %347 = vmatprep.mubr.f32.mxu0 0.0
  %348 = vmatmul.mubr.f32.gmra.mxu0 %v35
  %v349 = vpop.f32.mrf.mxu0
  %v350 = vadd.f32 %v221, %v349
  %v351 = vpop.f32.mrf.mxu0
  %352 = vmatprep.mubr.f32.mxu0 0.0
  %353 = vmatmul.mubr.f32.gmra.mxu0 %v36
  %v354 = vpop.f32.mrf.mxu0
  %v355 = vadd.f32 %v221, %v354
  %v356 = vpop.f32.mrf.mxu0
  %357 = vmatprep.mubr.f32.mxu0 0.0
  %358 = vmatmul.mubr.f32.gmra.mxu0 %v37
  %v359 = vpop.f32.mrf.mxu0
  %v360 = vadd.f32 %v221, %v359
  %v361 = vpop.f32.mrf.mxu0
  %362 = vmatprep.mubr.f32.mxu0 0.0
  %363 = vmatmul.mubr.f32.gmra.mxu0 %v38
  %v364 = vpop.f32.mrf.mxu0
  %v365 = vadd.f32 %v221, %v364
  %v366 = vpop.f32.mrf.mxu0
  %367 = vdwg.mxu0
  %v368 = vmax.f32 %v290, 0.0
  %v369 = vmax.f32 %v295, 0.0
  %v370 = vmax.f32 %v300, 0.0
  %v371 = vmax.f32 %v305, 0.0
  %v372 = vmax.f32 %v310, 0.0
  %v373 = vmax.f32 %v315, 0.0
  %v374 = vmax.f32 %v320, 0.0
  %v375 = vmax.f32 %v325, 0.0
  %v376 = vmax.f32 %v330, 0.0
  %v377 = vmax.f32 %v335, 0.0
  %v378 = vmax.f32 %v340, 0.0
  %v379 = vmax.f32 %v345, 0.0
  %v380 = vmax.f32 %v350, 0.0
  %v381 = vmax.f32 %v355, 0.0
  %v382 = vmax.f32 %v360, 0.0
  %v383 = vmax.f32 %v365, 0.0
  %v384 = vld [vmem:[%s4] sm:$0xff]
  %v385 = vld [vmem:[%s4 + $0x8] sm:$0xff]
  %v386 = vld [vmem:[%s4 + $0x10] sm:$0xff]
  %v387 = vld [vmem:[%s4 + $0x18] sm:$0xff]
  %v388 = vld [vmem:[%s4 + $0x20] sm:$0xff]
  %v389 = vld [vmem:[%s4 + $0x28] sm:$0xff]
  %v390 = vld [vmem:[%s4 + $0x30] sm:$0xff]
  %v391 = vld [vmem:[%s4 + $0x38] sm:$0xff]
  %v392 = vld [vmem:[%s4 + $0x40] sm:$0xff]
  %v393 = vld [vmem:[%s4 + $0x48] sm:$0xff]
  %v394 = vld [vmem:[%s4 + $0x50] sm:$0xff]
  %v395 = vld [vmem:[%s4 + $0x58] sm:$0xff]
  %v396 = vld [vmem:[%s4 + $0x60] sm:$0xff]
  %v397 = vld [vmem:[%s4 + $0x68] sm:$0xff]
  %v398 = vld [vmem:[%s4 + $0x70] sm:$0xff]
  %v399 = vld [vmem:[%s4 + $0x78] sm:$0xff]
  %400 = vmatprep.subr.mxu0 0.0
  %401 = vmatpush1.msra.mxu0 %v399
  %402 = vmatprep.subr.mxu0 0.0
  %403 = vmatpush1.msra.mxu0 %v398
  %404 = vmatprep.subr.mxu0 0.0
  %405 = vmatpush1.msra.mxu0 %v397
  %406 = vmatprep.subr.mxu0 0.0
  %407 = vmatpush1.msra.mxu0 %v396
  %408 = vmatprep.subr.mxu0 0.0
  %409 = vmatpush1.msra.mxu0 %v395
  %410 = vmatprep.subr.mxu0 0.0
  %411 = vmatpush1.msra.mxu0 %v394
  %412 = vmatprep.subr.mxu0 0.0
  %413 = vmatpush1.msra.mxu0 %v393
  %414 = vmatprep.subr.mxu0 0.0
  %415 = vmatpush1.msra.mxu0 %v392
  %416 = vmatprep.subr.mxu0 0.0
  %417 = vmatpush1.msra.mxu0 %v391
  %418 = vmatprep.subr.mxu0 0.0
  %419 = vmatpush1.msra.mxu0 %v390
  %420 = vmatprep.subr.mxu0 0.0
  %421 = vmatpush1.msra.mxu0 %v389
  %422 = vmatprep.subr.mxu0 0.0
  %423 = vmatpush1.msra.mxu0 %v388
  %424 = vmatprep.subr.mxu0 0.0
  %425 = vmatpush1.msra.mxu0 %v387
  %426 = vmatprep.subr.mxu0 0.0
  %427 = vmatpush1.msra.mxu0 %v386
  %428 = vmatprep.subr.mxu0 0.0
  %429 = vmatpush1.msra.mxu0 %v385
  %430 = vmatprep.subr.mxu0 0.0
  %431 = vmatpush1.msra.mxu0 %v384
  %432 = vmatprep.subr.mxu0 0.0
  %433 = vmatpush2.msra.mxu0 0.0
  %434 = vmatprep.subr.mxu0 0.0
  %435 = vmatpush2.msra.mxu0 0.0
  %436 = vmatprep.subr.mxu0 0.0
  %437 = vmatpush2.msra.mxu0 0.0
  %438 = vmatprep.subr.mxu0 0.0
  %439 = vmatpush2.msra.mxu0 0.0
  %440 = vmatprep.subr.mxu0 0.0
  %441 = vmatpush2.msra.mxu0 0.0
  %442 = vmatprep.subr.mxu0 0.0
  %443 = vmatpush2.msra.mxu0 0.0
  %444 = vmatprep.subr.mxu0 0.0
  %445 = vmatpush2.msra.mxu0 0.0
  %446 = vmatprep.subr.mxu0 0.0
  %447 = vmatpush2.msra.mxu0 0.0
  %448 = vmatprep.subr.mxu0 0.0
  %449 = vmatpush2.msra.mxu0 0.0
  %450 = vmatprep.subr.mxu0 0.0
  %451 = vmatpush2.msra.mxu0 0.0
  %452 = vmatprep.subr.mxu0 0.0
  %453 = vmatpush2.msra.mxu0 0.0
  %454 = vmatprep.subr.mxu0 0.0
  %455 = vmatpush2.msra.mxu0 0.0
  %456 = vmatprep.subr.mxu0 0.0
  %457 = vmatpush2.msra.mxu0 0.0
  %458 = vmatprep.subr.mxu0 0.0
  %459 = vmatpush2.msra.mxu0 0.0
  %460 = vmatprep.subr.mxu0 0.0
  %461 = vmatpush2.msra.mxu0 0.0
  %462 = vmatprep.subr.mxu0 0.0
  %463 = vmatpush2.msra.mxu0 0.0
  %464 = vmatprep.mubr.f32.mxu0 0.0
  %465 = vmatmul.mubr.f32.gmra.mxu0 %v368
  %v466 = vpop.f32.mrf.mxu0
  %v467 = vadd.f32 0.0, %v466
  %v468 = vpop.f32.mrf.mxu0
  %469 = vmatprep.mubr.f32.mxu0 0.0
  %470 = vmatmul.mubr.f32.gmra.mxu0 %v369
  %v471 = vpop.f32.mrf.mxu0
  %v472 = vadd.f32 0.0, %v471
  %v473 = vpop.f32.mrf.mxu0
  %474 = vmatprep.mubr.f32.mxu0 0.0
  %475 = vmatmul.mubr.f32.gmra.mxu0 %v370
  %v476 = vpop.f32.mrf.mxu0
  %v477 = vadd.f32 0.0, %v476
  %v478 = vpop.f32.mrf.mxu0
  %479 = vmatprep.mubr.f32.mxu0 0.0
  %480 = vmatmul.mubr.f32.gmra.mxu0 %v371
  %v481 = vpop.f32.mrf.mxu0
  %v482 = vadd.f32 0.0, %v481
  %v483 = vpop.f32.mrf.mxu0
  %484 = vmatprep.mubr.f32.mxu0 0.0
  %485 = vmatmul.mubr.f32.gmra.mxu0 %v372
  %v486 = vpop.f32.mrf.mxu0
  %v487 = vadd.f32 0.0, %v486
  %v488 = vpop.f32.mrf.mxu0
  %489 = vmatprep.mubr.f32.mxu0 0.0
  %490 = vmatmul.mubr.f32.gmra.mxu0 %v373
  %v491 = vpop.f32.mrf.mxu0
  %v492 = vadd.f32 0.0, %v491
  %v493 = vpop.f32.mrf.mxu0
  %494 = vmatprep.mubr.f32.mxu0 0.0
  %495 = vmatmul.mubr.f32.gmra.mxu0 %v374
  %v496 = vpop.f32.mrf.mxu0
  %v497 = vadd.f32 0.0, %v496
  %v498 = vpop.f32.mrf.mxu0
  %499 = vmatprep.mubr.f32.mxu0 0.0
  %500 = vmatmul.mubr.f32.gmra.mxu0 %v375
  %v501 = vpop.f32.mrf.mxu0
  %v502 = vadd.f32 0.0, %v501
  %v503 = vpop.f32.mrf.mxu0
  %504 = vmatprep.mubr.f32.mxu0 0.0
  %505 = vmatmul.mubr.f32.gmra.mxu0 %v376
  %v506 = vpop.f32.mrf.mxu0
  %v507 = vadd.f32 0.0, %v506
  %v508 = vpop.f32.mrf.mxu0
  %509 = vmatprep.mubr.f32.mxu0 0.0
  %510 = vmatmul.mubr.f32.gmra.mxu0 %v377
  %v511 = vpop.f32.mrf.mxu0
  %v512 = vadd.f32 0.0, %v511
  %v513 = vpop.f32.mrf.mxu0
  %514 = vmatprep.mubr.f32.mxu0 0.0
  %515 = vmatmul.mubr.f32.gmra.mxu0 %v378
  %v516 = vpop.f32.mrf.mxu0
  %v517 = vadd.f32 0.0, %v516
  %v518 = vpop.f32.mrf.mxu0
  %519 = vmatprep.mubr.f32.mxu0 0.0
  %520 = vmatmul.mubr.f32.gmra.mxu0 %v379
  %v521 = vpop.f32.mrf.mxu0
  %v522 = vadd.f32 0.0, %v521
  %v523 = vpop.f32.mrf.mxu0
  %524 = vmatprep.mubr.f32.mxu0 0.0
  %525 = vmatmul.mubr.f32.gmra.mxu0 %v380
  %v526 = vpop.f32.mrf.mxu0
  %v527 = vadd.f32 0.0, %v526
  %v528 = vpop.f32.mrf.mxu0
  %529 = vmatprep.mubr.f32.mxu0 0.0
  %530 = vmatmul.mubr.f32.gmra.mxu0 %v381
  %v531 = vpop.f32.mrf.mxu0
  %v532 = vadd.f32 0.0, %v531
  %v533 = vpop.f32.mrf.mxu0
  %534 = vmatprep.mubr.f32.mxu0 0.0
  %535 = vmatmul.mubr.f32.gmra.mxu0 %v382
  %v536 = vpop.f32.mrf.mxu0
  %v537 = vadd.f32 0.0, %v536
  %v538 = vpop.f32.mrf.mxu0
  %539 = vmatprep.mubr.f32.mxu0 0.0
  %540 = vmatmul.mubr.f32.gmra.mxu0 %v383
  %v541 = vpop.f32.mrf.mxu0
  %v542 = vadd.f32 0.0, %v541
  %v543 = vpop.f32.mrf.mxu0
  %544 = vdwg.mxu0
  %v545 = vld [vmem:[%s5] sm:$0x1]
  %v547 = vlaneseq
  %v548 = vshrl.u32 %v547, 7
  %v549 = vsub.s32 0, %v548
  %v550 = vrot.slane %v545, %v549
  %552 = vmatprep.subr.mxu0 0.0
  %553 = vmatpush1.msra.mxu0 %v542
  %554 = vmatprep.subr.mxu0 0.0
  %555 = vmatpush1.msra.mxu0 %v537
  %556 = vmatprep.subr.mxu0 0.0
  %557 = vmatpush1.msra.mxu0 %v532
  %558 = vmatprep.subr.mxu0 0.0
  %559 = vmatpush1.msra.mxu0 %v527
  %560 = vmatprep.subr.mxu0 0.0
  %561 = vmatpush1.msra.mxu0 %v522
  %562 = vmatprep.subr.mxu0 0.0
  %563 = vmatpush1.msra.mxu0 %v517
  %564 = vmatprep.subr.mxu0 0.0
  %565 = vmatpush1.msra.mxu0 %v512
  %566 = vmatprep.subr.mxu0 0.0
  %567 = vmatpush1.msra.mxu0 %v507
  %568 = vmatprep.subr.mxu0 0.0
  %569 = vmatpush1.msra.mxu0 %v502
  %570 = vmatprep.subr.mxu0 0.0
  %571 = vmatpush1.msra.mxu0 %v497
  %572 = vmatprep.subr.mxu0 0.0
  %573 = vmatpush1.msra.mxu0 %v492
  %574 = vmatprep.subr.mxu0 0.0
  %575 = vmatpush1.msra.mxu0 %v487
  %576 = vmatprep.subr.mxu0 0.0
  %577 = vmatpush1.msra.mxu0 %v482
  %578 = vmatprep.subr.mxu0 0.0
  %579 = vmatpush1.msra.mxu0 %v477
  %580 = vmatprep.subr.mxu0 0.0
  %581 = vmatpush1.msra.mxu0 %v472
  %582 = vmatprep.subr.mxu0 0.0
  %583 = vmatpush1.msra.mxu0 %v467
  %584 = vmatprep.subr.mxu0 0.0
  %585 = vmatpush2.msra.mxu0 0.0
  %586 = vmatprep.subr.mxu0 0.0
  %587 = vmatpush2.msra.mxu0 0.0
  %588 = vmatprep.subr.mxu0 0.0
  %589 = vmatpush2.msra.mxu0 0.0
  %590 = vmatprep.subr.mxu0 0.0
  %591 = vmatpush2.msra.mxu0 0.0
  %592 = vmatprep.subr.mxu0 0.0
  %593 = vmatpush2.msra.mxu0 0.0
  %594 = vmatprep.subr.mxu0 0.0
  %595 = vmatpush2.msra.mxu0 0.0
  %596 = vmatprep.subr.mxu0 0.0
  %597 = vmatpush2.msra.mxu0 0.0
  %598 = vmatprep.subr.mxu0 0.0
  %599 = vmatpush2.msra.mxu0 0.0
  %600 = vmatprep.subr.mxu0 0.0
  %601 = vmatpush2.msra.mxu0 0.0
  %602 = vmatprep.subr.mxu0 0.0
  %603 = vmatpush2.msra.mxu0 0.0
  %604 = vmatprep.subr.mxu0 0.0
  %605 = vmatpush2.msra.mxu0 0.0
  %606 = vmatprep.subr.mxu0 0.0
  %607 = vmatpush2.msra.mxu0 0.0
  %608 = vmatprep.subr.mxu0 0.0
  %609 = vmatpush2.msra.mxu0 0.0
  %610 = vmatprep.subr.mxu0 0.0
  %611 = vmatpush2.msra.mxu0 0.0
  %612 = vmatprep.subr.mxu0 0.0
  %613 = vmatpush2.msra.mxu0 0.0
  %614 = vmatprep.subr.mxu0 0.0
  %615 = vmatpush2.msra.mxu0 0.0
  %616 = vmatprep.mubr.f32.mxu0 0.0
  %617 = vmatmul.mubr.f32.gmra.mxu0 %v23
  %v618 = vpop.f32.mrf.mxu0
  %v619 = vadd.f32 %v550, %v618
  %v620 = vpop.f32.mrf.mxu0
  %621 = vmatprep.mubr.f32.mxu0 0.0
  %622 = vmatmul.mubr.f32.gmra.mxu0 %v24
  %v623 = vpop.f32.mrf.mxu0
  %v624 = vadd.f32 %v550, %v623
  %v625 = vpop.f32.mrf.mxu0
  %626 = vmatprep.mubr.f32.mxu0 0.0
  %627 = vmatmul.mubr.f32.gmra.mxu0 %v25
  %v628 = vpop.f32.mrf.mxu0
  %v629 = vadd.f32 %v550, %v628
  %v630 = vpop.f32.mrf.mxu0
  %631 = vmatprep.mubr.f32.mxu0 0.0
  %632 = vmatmul.mubr.f32.gmra.mxu0 %v26
  %v633 = vpop.f32.mrf.mxu0
  %v634 = vadd.f32 %v550, %v633
  %v635 = vpop.f32.mrf.mxu0
  %636 = vmatprep.mubr.f32.mxu0 0.0
  %637 = vmatmul.mubr.f32.gmra.mxu0 %v27
  %v638 = vpop.f32.mrf.mxu0
  %v639 = vadd.f32 %v550, %v638
  %v640 = vpop.f32.mrf.mxu0
  %641 = vmatprep.mubr.f32.mxu0 0.0
  %642 = vmatmul.mubr.f32.gmra.mxu0 %v28
  %v643 = vpop.f32.mrf.mxu0
  %v644 = vadd.f32 %v550, %v643
  %v645 = vpop.f32.mrf.mxu0
  %646 = vmatprep.mubr.f32.mxu0 0.0
  %647 = vmatmul.mubr.f32.gmra.mxu0 %v29
  %v648 = vpop.f32.mrf.mxu0
  %v649 = vadd.f32 %v550, %v648
  %v650 = vpop.f32.mrf.mxu0
  %651 = vmatprep.mubr.f32.mxu0 0.0
  %652 = vmatmul.mubr.f32.gmra.mxu0 %v30
  %v653 = vpop.f32.mrf.mxu0
  %v654 = vadd.f32 %v550, %v653
  %v655 = vpop.f32.mrf.mxu0
  %656 = vmatprep.mubr.f32.mxu0 0.0
  %657 = vmatmul.mubr.f32.gmra.mxu0 %v31
  %v658 = vpop.f32.mrf.mxu0
  %v659 = vadd.f32 %v550, %v658
  %v660 = vpop.f32.mrf.mxu0
  %661 = vmatprep.mubr.f32.mxu0 0.0
  %662 = vmatmul.mubr.f32.gmra.mxu0 %v32
  %v663 = vpop.f32.mrf.mxu0
  %v664 = vadd.f32 %v550, %v663
  %v665 = vpop.f32.mrf.mxu0
  %666 = vmatprep.mubr.f32.mxu0 0.0
  %667 = vmatmul.mubr.f32.gmra.mxu0 %v33
  %v668 = vpop.f32.mrf.mxu0
  %v669 = vadd.f32 %v550, %v668
  %v670 = vpop.f32.mrf.mxu0
  %671 = vmatprep.mubr.f32.mxu0 0.0
  %672 = vmatmul.mubr.f32.gmra.mxu0 %v34
  %v673 = vpop.f32.mrf.mxu0
  %v674 = vadd.f32 %v550, %v673
  %v675 = vpop.f32.mrf.mxu0
  %676 = vmatprep.mubr.f32.mxu0 0.0
  %677 = vmatmul.mubr.f32.gmra.mxu0 %v35
  %v678 = vpop.f32.mrf.mxu0
  %v679 = vadd.f32 %v550, %v678
  %v680 = vpop.f32.mrf.mxu0
  %681 = vmatprep.mubr.f32.mxu0 0.0
  %682 = vmatmul.mubr.f32.gmra.mxu0 %v36
  %v683 = vpop.f32.mrf.mxu0
  %v684 = vadd.f32 %v550, %v683
  %v685 = vpop.f32.mrf.mxu0
  %686 = vmatprep.mubr.f32.mxu0 0.0
  %687 = vmatmul.mubr.f32.gmra.mxu0 %v37
  %v688 = vpop.f32.mrf.mxu0
  %v689 = vadd.f32 %v550, %v688
  %v690 = vpop.f32.mrf.mxu0
  %691 = vmatprep.mubr.f32.mxu0 0.0
  %692 = vmatmul.mubr.f32.gmra.mxu0 %v38
  %v693 = vpop.f32.mrf.mxu0
  %v694 = vadd.f32 %v550, %v693
  %v695 = vpop.f32.mrf.mxu0
  %696 = vdwg.mxu0
  %v697 = vmax.f32 %v619, 0.0
  %v698 = vmax.f32 %v624, 0.0
  %v699 = vmax.f32 %v629, 0.0
  %v700 = vmax.f32 %v634, 0.0
  %v701 = vmax.f32 %v639, 0.0
  %v702 = vmax.f32 %v644, 0.0
  %v703 = vmax.f32 %v649, 0.0
  %v704 = vmax.f32 %v654, 0.0
  %v705 = vmax.f32 %v659, 0.0
  %v706 = vmax.f32 %v664, 0.0
  %v707 = vmax.f32 %v669, 0.0
  %v708 = vmax.f32 %v674, 0.0
  %v709 = vmax.f32 %v679, 0.0
  %v710 = vmax.f32 %v684, 0.0
  %v711 = vmax.f32 %v689, 0.0
  %v712 = vmax.f32 %v694, 0.0
  %713 = vst [vmem:[%s6] sm:$0xff] %v697
  %714 = vst [vmem:[%s6 + $0x8] sm:$0xff] %v698
  %715 = vst [vmem:[%s6 + $0x10] sm:$0xff] %v699
  %716 = vst [vmem:[%s6 + $0x18] sm:$0xff] %v700
  %717 = vst [vmem:[%s6 + $0x20] sm:$0xff] %v701
  %718 = vst [vmem:[%s6 + $0x28] sm:$0xff] %v702
  %719 = vst [vmem:[%s6 + $0x30] sm:$0xff] %v703
  %720 = vst [vmem:[%s6 + $0x38] sm:$0xff] %v704
  %721 = vst [vmem:[%s6 + $0x40] sm:$0xff] %v705
  %722 = vst [vmem:[%s6 + $0x48] sm:$0xff] %v706
  %723 = vst [vmem:[%s6 + $0x50] sm:$0xff] %v707
  %724 = vst [vmem:[%s6 + $0x58] sm:$0xff] %v708
  %725 = vst [vmem:[%s6 + $0x60] sm:$0xff] %v709
  %726 = vst [vmem:[%s6 + $0x68] sm:$0xff] %v710
  %727 = vst [vmem:[%s6 + $0x70] sm:$0xff] %v711
  %728 = vst [vmem:[%s6 + $0x78] sm:$0xff] %v712
  // Predicated region
  $region26: #{attribute_decoder.1} parent=0 // pred_check
    _
  $region27: #{attribute_decoder.1} parent=0 // pred_check_branch
    %730 = sbr.rel (0) target = $region29
  $region28: #{attribute_decoder.1} parent=0 // pred_region
    _
  $region29: #{attribute_decoder.1} parent=0 // pred_fallthru
    _
  // Predicated region
  $region30: #{attribute_decoder.1} parent=0 // pred_check
    _
  $region31: #{attribute_decoder.1} parent=0 // pred_check_branch
    %732 = sbr.rel (0) target = $region33
  $region32: #{attribute_decoder.1} parent=0 // pred_region
    _
  $region33: #{attribute_decoder.1} parent=0 // pred_fallthru
    _

</llo_original>
